<compile_context>
chip_gen: v7x
topology: tpu7x:2x2x1
jax: 0.10.0
libtpu: 0.0.40
codegen_flags: <defaults>
</compile_context>

<pallas_src>
import jax
import jax.numpy as jnp
from jax.experimental import pallas as pl
from jax.experimental.pallas import tpu as pltpu


def _round_up(n, m):
    return ((n + m - 1) // m) * m


def _mix_kernel(w1_ref, w2_ref, x_ref, o_ref):
    """Fused Mix tile: out = func(x, W1·x, W2·x) = x + W1·x + W2·x.

    w1_ref, w2_ref : (C, C)   VMEM (whole weight matrices, re-used every step)
    x_ref, o_ref   : (C, TN)  VMEM tiles (TN lane-dense, multiple of 128)
    """
    xf = x_ref[...].astype(jnp.float32)
    # The nets' results are computed separately (not pre-folded into one matrix)
    # so the structure still matches Mix(func, net1, net2) for arbitrary `func`.
    r1 = jnp.dot(w1_ref[...].astype(jnp.float32), xf,
                 preferred_element_type=jnp.float32)
    r2 = jnp.dot(w2_ref[...].astype(jnp.float32), xf,
                 preferred_element_type=jnp.float32)
    o_ref[...] = (xf + r1 + r2).astype(o_ref.dtype)


def mix_forward(x_nchw, w1_cc, w2_cc, *, tn_target=4096):
    """Pallas-backed Mix.forward(x): fuses the nets' .res computation with func.

    Single HBM pass over x in, out: read each (C, TN) spatial tile once, mix the
    channels on the MXU, write the result once.
    """
    B, C, H, W = x_nchw.shape
    HW = H * W

    # Cap TN so double-buffered in+out (~16*C*TN bytes with f32 accumulation) stays
    # comfortably inside v5e's 16 MiB default scoped VMEM (v6e/v7x have >= 32 MiB).
    vmem_budget = 8 * 1024 * 1024
    tn_cap = max(128, (vmem_budget // (16 * C)) // 128 * 128)
    tn_target = min(tn_target, tn_cap)

    # Lane-dense tile: multiple of 128; the array itself is NOT padded -- the grid
    # uses cdiv and the (possibly ragged) last tile is clipped on write-back.
    TN = min(_round_up(HW, 128), tn_target)
    # v7x megacore: make sure there are >= 2 parallel grid steps when possible.
    if B * pl.cdiv(HW, TN) < 2 and HW > 128:
        TN = _round_up(pl.cdiv(HW, 2), 128)
    n_t = pl.cdiv(HW, TN)

    x3 = x_nchw.reshape(B, C, HW)

    w_spec = pl.BlockSpec((C, C), lambda b, t: (0, 0))            # tiny, VMEM-resident
    x_spec = pl.BlockSpec((None, C, TN), lambda b, t: (b, 0, t))  # kernel sees (C, TN)

    out = pl.pallas_call(
        _mix_kernel,
        out_shape=jax.ShapeDtypeStruct((B, C, HW), x3.dtype),
        grid=(B, n_t),
        in_specs=[w_spec, w_spec, x_spec],   # w1, w2, x
        out_specs=x_spec,
        compiler_params=pltpu.CompilerParams(
            dimension_semantics=("parallel", "parallel")),
    )(w1_cc, w2_cc, x3)

    return out.reshape(B, C, H, W)


def _net_res(x_nchw, w_cc):
    """Reference-only glue: the 'net' whose cached .res Mix would consume."""
    return jnp.einsum("oc,bchw->bohw", w_cc, x_nchw)


# TODO(synk): `Mix` is generic over `func` and the sub-`nets`; this kernel implements
# the concrete elementwise-sum func with 1x1-conv nets used throughout this series.

if __name__ == "__main__":
    key = jax.random.PRNGKey(0)
    kx, k1, k2 = jax.random.split(key, 3)

    B, C, H, W = 2, 4, 16, 16
    x = jax.random.normal(kx, (B, C, H, W), dtype=jnp.float32)

    # Deterministic "net" parameters (1x1-conv style per-channel mixers).
    w1 = jax.random.normal(k1, (C, C), dtype=jnp.float32) * 0.1
    w2 = jax.random.normal(k2, (C, C), dtype=jnp.float32) * 0.1

    out = mix_forward(x, w1, w2)
    jax.block_until_ready(out)

    # Reference: Mix semantics with res1/res2 materialized the un-fused way.
    ref = x + _net_res(x, w1) + _net_res(x, w2)
    assert out.shape == (B, C, H, W)
    assert jnp.allclose(out, ref, atol=1e-5, rtol=1e-5), "mismatch vs reference"

    print("KERNEL_OK")
</pallas_src>

<mosaic_0001>
module attributes {stable_mosaic.version = 11 : i64} {
  func.func @_mix_kernel(%arg0: i32, %arg1: i32, %arg2: memref<4x4xf32, #tpu.memory_space<vmem>>, %arg3: memref<4x4xf32, #tpu.memory_space<vmem>>, %arg4: memref<1x4x256xf32, #tpu.memory_space<vmem>>, %arg5: memref<1x4x256xf32, #tpu.memory_space<vmem>>) attributes {dimension_semantics = [#tpu.dimension_semantics<parallel>, #tpu.dimension_semantics<parallel>], iteration_bounds = array<i64: 2, 1>, scalar_prefetch = 0 : i64, scratch_operands = 0 : i64, tpu.core_type = #tpu.core_type<tc>, window_params = [{pipeline_mode = #tpu.pipeline_mode<synchronous>, transform_indices = @transform_0, window_bounds = array<i64: 4, 4>}, {pipeline_mode = #tpu.pipeline_mode<synchronous>, transform_indices = @transform_1, window_bounds = array<i64: 4, 4>}, {transform_indices = @transform_2, window_bounds = array<i64: 1, 4, 256>}, {transform_indices = @transform_3, window_bounds = array<i64: 1, 4, 256>}]} {
    %c0 = arith.constant 0 : index
    %c0_0 = arith.constant 0 : index
    %c0_1 = arith.constant 0 : index
    %0 = vector.load %arg4[%c0, %c0_0, %c0_1] : memref<1x4x256xf32, #tpu.memory_space<vmem>>, vector<1x4x256xf32>
    %1 = vector.shape_cast %0 : vector<1x4x256xf32> to vector<4x256xf32>
    %c0_2 = arith.constant 0 : index
    %c0_3 = arith.constant 0 : index
    %2 = vector.load %arg2[%c0_2, %c0_3] : memref<4x4xf32, #tpu.memory_space<vmem>>, vector<4x4xf32>
    %cst = arith.constant dense<0.000000e+00> : vector<4x256xf32>
    %3 = tpu.matmul %2, %1, %cst {dimension_numbers = #tpu.dot_dimension_numbers<[1], [0], [0], [1], [0, 0, 1, 1], [], []>} : vector<4x4xf32>, vector<4x256xf32>, vector<4x256xf32> -> vector<4x256xf32>
    %c0_4 = arith.constant 0 : index
    %c0_5 = arith.constant 0 : index
    %4 = vector.load %arg3[%c0_4, %c0_5] : memref<4x4xf32, #tpu.memory_space<vmem>>, vector<4x4xf32>
    %cst_6 = arith.constant dense<0.000000e+00> : vector<4x256xf32>
    %5 = tpu.matmul %4, %1, %cst_6 {dimension_numbers = #tpu.dot_dimension_numbers<[1], [0], [0], [1], [0, 0, 1, 1], [], []>} : vector<4x4xf32>, vector<4x256xf32>, vector<4x256xf32> -> vector<4x256xf32>
    %6 = arith.addf %1, %3 : vector<4x256xf32>
    %7 = arith.addf %6, %5 : vector<4x256xf32>
    %c0_7 = arith.constant 0 : index
    %c0_8 = arith.constant 0 : index
    %c0_9 = arith.constant 0 : index
    %8 = vector.load %arg5[%c0_7, %c0_8, %c0_9] : memref<1x4x256xf32, #tpu.memory_space<vmem>>, vector<1x4x256xf32>
    %9 = vector.shape_cast %8 : vector<1x4x256xf32> to vector<4x256xf32>
    %10 = vector.shape_cast %7 : vector<4x256xf32> to vector<1x4x256xf32>
    tpu.vector_store %arg5[%c0_7, %c0_8, %c0_9], %10 {strides = array<i32>} : memref<1x4x256xf32, #tpu.memory_space<vmem>>, vector<1x4x256xf32>,
    return
  }
  func.func @transform_0(%arg0: i32, %arg1: i32) -> (i32, i32) {
    %c0_i32 = arith.constant 0 : i32
    %c0_i32_0 = arith.constant 0 : i32
    %c0_i32_1 = arith.constant 0 : i32
    return %c0_i32, %c0_i32_0 : i32, i32
  }
  func.func @transform_1(%arg0: i32, %arg1: i32) -> (i32, i32) {
    %c0_i32 = arith.constant 0 : i32
    %c0_i32_0 = arith.constant 0 : i32
    %c0_i32_1 = arith.constant 0 : i32
    return %c0_i32, %c0_i32_0 : i32, i32
  }
  func.func @transform_2(%arg0: i32, %arg1: i32) -> (i32, i32, i32) {
    %c0_i32 = arith.constant 0 : i32
    %c0_i32_0 = arith.constant 0 : i32
    return %arg0, %c0_i32, %arg1 : i32, i32, i32
  }
  func.func @transform_3(%arg0: i32, %arg1: i32) -> (i32, i32, i32) {
    %c0_i32 = arith.constant 0 : i32
    %c0_i32_0 = arith.constant 0 : i32
    return %arg0, %c0_i32, %arg1 : i32, i32, i32
  }
}

</mosaic_0001>

<llo_original>
// kernel: tpu_custom_call.1
$region0: #{tpu_custom_call.1}
  #allocation0 [shape = 'u32[]', space=smem, size = 0x4, offset = 0x4, fixed_abs, tag = 'smem constant byte address 0x4 - core index']
  #allocation1 [shape = 'u32[144,128]{1,0:T(1,128)}', space=vmem, size = 0x12000, scoped, tag = 'internal scratch']
  %s0 = inlined_call_operand.hbm [shape: f32[4,4], index: 0, kind: input, shape index: {}]
  %s1 = inlined_call_operand.hbm [shape: f32[4,4], index: 1, kind: input, shape index: {}]
  %s2 = inlined_call_operand.hbm [shape: f32[2,4,256], index: 2, kind: input, shape index: {}]
  %s3 = inlined_call_operand.hbm [shape: f32[2,4,256], index: 3, kind: output, shape index: {}]
  %s4 = sld [smem:[#allocation0]]
  $region57: #{tpu_custom_call.1} parent=0
    _
  %s6 = ssub.s32 1, %s4
  %s7 = scalar_select 0, %s6, %s4
  $region1: #{tpu_custom_call.1} parent=0
    #allocation2 [shape = 'u8[2048]{0}', space=vmem, size = 0x800, scoped, tag = 'input window, operand 0, single buffered']
    #allocation3 [shape = 's32[2]{0}', space=sflag, size = 0x8, scoped, tag = 'scoped memory for tpu_custom_call.1']
    #allocation4 [shape = 's32[2]{0}', space=sflag, size = 0x8, scoped, tag = 'scoped memory for tpu_custom_call.1']
    #allocation5 [shape = 'u8[2048]{0}', space=vmem, size = 0x800, scoped, tag = 'input window, operand 1, single buffered']
    #allocation6 [shape = 's32[1]{0}', space=sflag, size = 0x4, scoped, tag = 'scoped memory for tpu_custom_call.1']
    #allocation7 [shape = 'u8[8192]{0}', space=vmem, size = 0x2000, scoped, tag = 'input window, operand 2']
    #allocation8 [shape = 'u8[8192]{0}', space=vmem, size = 0x2000, scoped, tag = 'output window, operand 0']
    %8 = vsyncpa [#allocation3], 0
    %9 = vsyncpa [#allocation6], 0
    %10 = vsyncpa [#allocation4], 0
    %s11 = scalar_lea.sflag [#allocation4], 1
    %12 = vsyncpa %s11, 0
    loop: start=0, step=1, limit=4
    $region2: #{tpu_custom_call.1} parent=1 // loop_pre_header
      _
    $region3: #{tpu_custom_call.1} parent=1 // loop_header
      %s14 = sphi 0, %s18
      %p15 = scmp.ge.s32.totalorder %s14, 4
      %s21 = sphi 0, %s33
      %s22 = sphi 0, %s29
      %s23 = sphi 0, %s21
      %s24 = sphi 0, %s22
      %s25 = sphi 0, %s23
      %s26 = sphi 0, %s24
      %s34 = sphi 0, %s34
      %s36 = sphi 0, %s34
      %s37 = sphi 0, %s36
      %s51 = sphi 0, %s37
      %s55 = sphi 0, %s55
      %s57 = sphi 0, %s55
      %s58 = sphi 0, %s57
      %s72 = sphi 0, %s58
      %s80 = sphi 0, %s82
      %s83 = sphi 0, %s80
      %s84 = sphi 0, %s83
      %s100 = sphi 0, %s84
      %s108 = sphi 0, %s110
      %s111 = sphi 0, %s108
      %s112 = sphi 0, %s111
      %s128 = sphi 0, %s112
    $region4: #{tpu_custom_call.1} parent=1 // loop_header_branch
      %17 = sbr.rel (%p15) target = $region8
    $region5: #{tpu_custom_call.1} parent=1 // loop_body
      %s19 = ssub.s32 %s14, 1
      %s20 = ssub.s32 %s14, 2
      %s27 = sadd.s32 1, %s22
      %p28 = scmp.ge.s32.totalorder %s27, 1
      %s29 = scalar_select %p28, 0, %s27
      %s30 = sadd.s32 1, %s21
      %s31 = scalar_select %p28, %s30, %s21
      %p32 = scmp.ge.s32.totalorder %s31, 2
      %s33 = scalar_select %p32, 0, %s31
      %s35 = sadd.s32 %s34, 1
      %p38 = scmp.eq.s32.totalorder %s14, 1
      %p39 = scmp.ne.s32.totalorder %s34, %s36
      %p40 = scmp.eq.s32.totalorder %s14, 0
      %p41 = por %p39, %p40
      %p42 = scmp.ne.s32.totalorder %s34, %s36
      %p43 = scmp.eq.s32.totalorder %s19, 1
      %p44 = por %p42, %p43
      %p45 = scmp.ne.s32.totalorder %s36, %s37
      %p46 = scmp.eq.s32.totalorder %s19, 0
      %p47 = por %p45, %p46
      %p48 = scmp.ne.s32.totalorder %s36, %s37
      %p49 = scmp.eq.s32.totalorder %s20, 1
      %p50 = por %p48, %p49
      %p52 = scmp.ne.s32.totalorder %s37, %s51
      %p53 = scmp.eq.s32.totalorder %s20, 0
      %p54 = por %p52, %p53
      %s56 = sadd.s32 %s55, 1
      %p59 = scmp.eq.s32.totalorder %s14, 1
      %p60 = scmp.ne.s32.totalorder %s55, %s57
      %p61 = scmp.eq.s32.totalorder %s14, 0
      %p62 = por %p60, %p61
      %p63 = scmp.ne.s32.totalorder %s55, %s57
      %p64 = scmp.eq.s32.totalorder %s19, 1
      %p65 = por %p63, %p64
      %p66 = scmp.ne.s32.totalorder %s57, %s58
      %p67 = scmp.eq.s32.totalorder %s19, 0
      %p68 = por %p66, %p67
      %p69 = scmp.ne.s32.totalorder %s57, %s58
      %p70 = scmp.eq.s32.totalorder %s20, 1
      %p71 = por %p69, %p70
      %p73 = scmp.ne.s32.totalorder %s58, %s72
      %p74 = scmp.eq.s32.totalorder %s20, 0
      %p75 = por %p73, %p74
      %s76 = ssub.s32 %s21, %s33
      %s77 = ssub.s32 %s22, %s29
      %s78 = sor.u32 %s76, %s77
      %p79 = scmp.eq.s32.totalorder %s78, 0
      %s81 = sadd.s32 %s80, 1
      %s82 = scalar_select %p79, %s80, %s81
      %p85 = pneg %p79
      %p86 = scmp.eq.s32.totalorder %s14, 1
      %p87 = por %p85, %p86
      %p88 = scmp.ne.s32.totalorder %s80, %s83
      %p89 = scmp.eq.s32.totalorder %s14, 0
      %p90 = por %p88, %p89
      %p91 = scmp.ne.s32.totalorder %s80, %s83
      %p92 = scmp.eq.s32.totalorder %s19, 1
      %p93 = por %p91, %p92
      %p94 = scmp.ne.s32.totalorder %s83, %s84
      %p95 = scmp.eq.s32.totalorder %s19, 0
      %p96 = por %p94, %p95
      %p97 = scmp.ne.s32.totalorder %s83, %s84
      %p98 = scmp.eq.s32.totalorder %s20, 1
      %p99 = por %p97, %p98
      %p101 = scmp.ne.s32.totalorder %s84, %s100
      %p102 = scmp.eq.s32.totalorder %s20, 0
      %p103 = por %p101, %p102
      %s104 = ssub.s32 %s21, %s33
      %s105 = ssub.s32 %s22, %s29
      %s106 = sor.u32 %s104, %s105
      %p107 = scmp.eq.s32.totalorder %s106, 0
      %s109 = sadd.s32 %s108, 1
      %s110 = scalar_select %p107, %s108, %s109
      %p113 = pneg %p107
      %p114 = scmp.eq.s32.totalorder %s14, 1
      %p115 = por %p113, %p114
      %p116 = scmp.ne.s32.totalorder %s108, %s111
      %p117 = scmp.eq.s32.totalorder %s14, 0
      %p118 = por %p116, %p117
      %p119 = scmp.ne.s32.totalorder %s108, %s111
      %p120 = scmp.eq.s32.totalorder %s19, 1
      %p121 = por %p119, %p120
      %p122 = scmp.ne.s32.totalorder %s111, %s112
      %p123 = scmp.eq.s32.totalorder %s19, 0
      %p124 = por %p122, %p123
      %p125 = scmp.ne.s32.totalorder %s111, %s112
      %p126 = scmp.eq.s32.totalorder %s20, 1
      %p127 = por %p125, %p126
      %p129 = scmp.ne.s32.totalorder %s112, %s128
      %p130 = scmp.eq.s32.totalorder %s20, 0
      %p131 = por %p129, %p130
      %p132 = scmp.le.s32.totalorder 1, %s14
      %p133 = scmp.lt.s32.totalorder %s14, 3
      %p134 = pnand %p132, %p133
      %p135 = pneg %p134
      // Predicated region
      $region9: #{tpu_custom_call.1} parent=5 // pred_check
        _
      $region10: #{tpu_custom_call.1} parent=5 // pred_check_branch
        %137 = sbr.rel (%p134) target = $region12
      $region11: #{tpu_custom_call.1} parent=5 // pred_region
        %s138 = ssub.s32 %s14, 1
        // Predicated region
        $region13: #{tpu_custom_call.1} parent=11 // pred_check
          %p139 = pneg %p47
        $region14: #{tpu_custom_call.1} parent=11 // pred_check_branch
          %141 = sbr.rel (%p139) target = $region16
        $region15: #{tpu_custom_call.1} parent=11 // pred_region
          %s143 = ssub.s32 64, 64
          %144 = vsyncadd [#allocation3], %s143
          %s146 = sshll.u32 [#allocation2], 4
          %s147 = int_to_ptr.vmem [resolvable:$true] %s146
          %149 = dma.hbm_to_vmem [thread:$0]  %s0, 64, %s147, [#allocation3]
        $region16: #{tpu_custom_call.1} parent=11 // pred_fallthru
          _
        // Predicated region
        $region17: #{tpu_custom_call.1} parent=11 // pred_check
          %p150 = pneg %p68
        $region18: #{tpu_custom_call.1} parent=11 // pred_check_branch
          %152 = sbr.rel (%p150) target = $region20
        $region19: #{tpu_custom_call.1} parent=11 // pred_region
          %s154 = ssub.s32 64, 64
          %155 = vsyncadd [#allocation6], %s154
          %s157 = sshll.u32 [#allocation5], 4
          %s158 = int_to_ptr.vmem [resolvable:$true] %s157
          %160 = dma.hbm_to_vmem [thread:$0]  %s1, 64, %s158, [#allocation6]
        $region20: #{tpu_custom_call.1} parent=11 // pred_fallthru
          _
      $region12: #{tpu_custom_call.1} parent=5 // pred_fallthru
        _
      %p161 = scmp.lt.s32.totalorder %s14, 2
      // Predicated region
      $region21: #{tpu_custom_call.1} parent=5 // pred_check
        %p162 = pneg %p161
      $region22: #{tpu_custom_call.1} parent=5 // pred_check_branch
        %164 = sbr.rel (%p162) target = $region24
      $region23: #{tpu_custom_call.1} parent=5 // pred_region
        // Predicated region
        $region25: #{tpu_custom_call.1} parent=23 // pred_check
          %p165 = pneg %p90
        $region26: #{tpu_custom_call.1} parent=23 // pred_check_branch
          %167 = sbr.rel (%p165) target = $region28
        $region27: #{tpu_custom_call.1} parent=23 // pred_region
          %s168 = sand.u32 %s14, 1
          %s169 = scalar_lea.sflag [#allocation3], %s168
          %s170 = sand.u32 %s80, 1
          %s171 = smul.addr %s170, 8
          %s172 = scalar_lea.vmem [#allocation7], %s171
          %s173 = smul.u32 2, %s22
          %s175 = ssub.s32 128, 128
          %176 = vsyncadd %s169, %s175
          %s177 = smul.addr %s21, 2
          %s178 = sadd.s32 %s173, %s177
          %s179 = smul.addr %s178, 64
          %s180 = scalar_lea.hbm %s2, %s179
          %s182 = sshll.u32 %s172, 4
          %s183 = int_to_ptr.vmem [resolvable:$true] %s182
          %185 = dma.hbm_to_vmem [thread:$0]  %s180, 128, %s183, %s169
        $region28: #{tpu_custom_call.1} parent=23 // pred_fallthru
          _
      $region24: #{tpu_custom_call.1} parent=5 // pred_fallthru
        _
      %p186 = scmp.le.s32.totalorder 1, %s14
      %p187 = scmp.lt.s32.totalorder %s14, 3
      %p188 = pnand %p186, %p187
      %p189 = pneg %p188
      // Predicated region
      $region29: #{tpu_custom_call.1} parent=5 // pred_check
        _
      $region30: #{tpu_custom_call.1} parent=5 // pred_check_branch
        %191 = sbr.rel (%p188) target = $region32
      $region31: #{tpu_custom_call.1} parent=5 // pred_region
        %s192 = ssub.s32 %s14, 1
        // Predicated region
        $region33: #{tpu_custom_call.1} parent=31 // pred_check
          %p193 = pneg %p47
        $region34: #{tpu_custom_call.1} parent=31 // pred_check_branch
          %195 = sbr.rel (%p193) target = $region36
        $region35: #{tpu_custom_call.1} parent=31 // pred_region
          %196 = dma.done [#allocation3], 64
        $region36: #{tpu_custom_call.1} parent=31 // pred_fallthru
          _
        // Predicated region
        $region37: #{tpu_custom_call.1} parent=31 // pred_check
          %p197 = pneg %p68
        $region38: #{tpu_custom_call.1} parent=31 // pred_check_branch
          %199 = sbr.rel (%p197) target = $region40
        $region39: #{tpu_custom_call.1} parent=31 // pred_region
          %200 = dma.done [#allocation6], 64
        $region40: #{tpu_custom_call.1} parent=31 // pred_fallthru
          _
        %s201 = sand.u32 %s19, 1
        %s202 = scalar_lea.sflag [#allocation3], %s201
        %s203 = sand.u32 %s83, 1
        %s204 = smul.addr %s203, 8
        %s205 = scalar_lea.vmem [#allocation7], %s204
        // Predicated region
        $region41: #{tpu_custom_call.1} parent=31 // pred_check
          %p206 = pneg %p96
        $region42: #{tpu_custom_call.1} parent=31 // pred_check_branch
          %208 = sbr.rel (%p206) target = $region44
        $region43: #{tpu_custom_call.1} parent=31 // pred_region
          %209 = dma.done %s202, 128
        $region44: #{tpu_custom_call.1} parent=31 // pred_fallthru
          _
        %p210 = pneg %p47
        %p211 = pneg %p44
        %p212 = pneg %p68
        %p213 = pneg %p65
        %s214 = sand.u32 %s19, 1
        %s215 = scalar_lea.sflag [#allocation3], %s214
        %s216 = sand.u32 %s83, 1
        %s217 = smul.addr %s216, 8
        %s218 = scalar_lea.vmem [#allocation7], %s217
        %p219 = pneg %p96
        %p220 = pneg %p93
        %p221 = pneg %p124
        %p222 = pneg %p121
        %s223 = sand.u32 %s111, 1
        %s224 = scalar_lea.sflag [#allocation4], %s223
        %s225 = sand.u32 %s111, 1
        %s226 = smul.addr %s225, 8
        %s227 = scalar_lea.vmem [#allocation8], %s226
        %s228 = smul.u32 2, %s24
        %s229 = smul.u32 2, %s24
        %v230 = vld [vmem:[%s205] sm:$0xff]
        %v231 = vld [vmem:[#allocation2] sm:$0xf]
        %v233 = vcombine.high %v230, %v230
        %vm234 = vcmask 31744
        %v236 = vsel %vm234, %v231, 0
        %vm238 = vcmask 1043456
        %v239 = vsel %vm238, %v230, 0
        %v241 = vsel %vm238, %v233, 0
        %243 = vmatprep.subr.mxu0 %v241
        %244 = vmatpush1.msra.mxu0 %v239
        %245 = vmatprep.subr.mxu0 0.0
        %246 = vmatpush1.msra.mxu0 0.0
        %247 = vmatprep.subr.mxu0 0.0
        %248 = vmatpush1.msra.mxu0 0.0
        %249 = vmatprep.subr.mxu0 0.0
        %250 = vmatpush1.msra.mxu0 0.0
        %251 = vmatprep.subr.mxu0 0.0
        %252 = vmatpush1.msra.mxu0 0.0
        %253 = vmatprep.subr.mxu0 0.0
        %254 = vmatpush1.msra.mxu0 0.0
        %255 = vmatprep.subr.mxu0 0.0
        %256 = vmatpush1.msra.mxu0 0.0
        %257 = vmatprep.subr.mxu0 0.0
        %258 = vmatpush1.msra.mxu0 0.0
        %259 = vmatprep.subr.mxu0 0.0
        %260 = vmatpush1.msra.mxu0 0.0
        %261 = vmatprep.subr.mxu0 0.0
        %262 = vmatpush1.msra.mxu0 0.0
        %263 = vmatprep.subr.mxu0 0.0
        %264 = vmatpush1.msra.mxu0 0.0
        %265 = vmatprep.subr.mxu0 0.0
        %266 = vmatpush1.msra.mxu0 0.0
        %267 = vmatprep.subr.mxu0 0.0
        %268 = vmatpush1.msra.mxu0 0.0
        %269 = vmatprep.subr.mxu0 0.0
        %270 = vmatpush1.msra.mxu0 0.0
        %271 = vmatprep.subr.mxu0 0.0
        %272 = vmatpush1.msra.mxu0 0.0
        %273 = vmatprep.subr.mxu0 0.0
        %274 = vmatpush1.msra.mxu0 0.0
        %275 = vmatprep.subr.mxu0 0.0
        %276 = vmatpush1.msra.mxu0 0.0
        %277 = vmatprep.subr.mxu0 0.0
        %278 = vmatpush1.msra.mxu0 0.0
        %279 = vmatprep.subr.mxu0 0.0
        %280 = vmatpush1.msra.mxu0 0.0
        %281 = vmatprep.subr.mxu0 0.0
        %282 = vmatpush1.msra.mxu0 0.0
        %283 = vmatprep.subr.mxu0 0.0
        %284 = vmatpush1.msra.mxu0 0.0
        %285 = vmatprep.subr.mxu0 0.0
        %286 = vmatpush1.msra.mxu0 0.0
        %287 = vmatprep.subr.mxu0 0.0
        %288 = vmatpush1.msra.mxu0 0.0
        %289 = vmatprep.subr.mxu0 0.0
        %290 = vmatpush1.msra.mxu0 0.0
        %291 = vmatprep.subr.mxu0 0.0
        %292 = vmatpush1.msra.mxu0 0.0
        %293 = vmatprep.subr.mxu0 0.0
        %294 = vmatpush1.msra.mxu0 0.0
        %295 = vmatprep.subr.mxu0 0.0
        %296 = vmatpush1.msra.mxu0 0.0
        %297 = vmatprep.subr.mxu0 0.0
        %298 = vmatpush1.msra.mxu0 0.0
        %299 = vmatprep.subr.mxu0 0.0
        %300 = vmatpush1.msra.mxu0 0.0
        %301 = vmatprep.subr.mxu0 0.0
        %302 = vmatpush1.msra.mxu0 0.0
        %303 = vmatprep.subr.mxu0 0.0
        %304 = vmatpush1.msra.mxu0 0.0
        %305 = vmatprep.subr.mxu0 0.0
        %306 = vmatpush1.msra.mxu0 0.0
        %307 = vmatprep.mubr.f32.mxu0 0.0
        %308 = vmatmul.mubr.f32.gmra.mrb[0].mxu0 %v236
        %v309 = vpop.f32.mrb[0].mxu0
        %v310 = vadd.f32 0.0, %v309
        %v311 = vpop.f32.mrb[0].mxu0
        %v312 = vadd.f32 0.0, %v311
        %313 = vdwg.mxu0
        %v314 = vld [vmem:[#allocation5] sm:$0xf]
        %v316 = vsel %vm234, %v314, 0
        %318 = vmatprep.subr.mxu0 %v241
        %319 = vmatpush1.msra.mxu0 %v239
        %320 = vmatprep.subr.mxu0 0.0
        %321 = vmatpush1.msra.mxu0 0.0
        %322 = vmatprep.subr.mxu0 0.0
        %323 = vmatpush1.msra.mxu0 0.0
        %324 = vmatprep.subr.mxu0 0.0
        %325 = vmatpush1.msra.mxu0 0.0
        %326 = vmatprep.subr.mxu0 0.0
        %327 = vmatpush1.msra.mxu0 0.0
        %328 = vmatprep.subr.mxu0 0.0
        %329 = vmatpush1.msra.mxu0 0.0
        %330 = vmatprep.subr.mxu0 0.0
        %331 = vmatpush1.msra.mxu0 0.0
        %332 = vmatprep.subr.mxu0 0.0
        %333 = vmatpush1.msra.mxu0 0.0
        %334 = vmatprep.subr.mxu0 0.0
        %335 = vmatpush1.msra.mxu0 0.0
        %336 = vmatprep.subr.mxu0 0.0
        %337 = vmatpush1.msra.mxu0 0.0
        %338 = vmatprep.subr.mxu0 0.0
        %339 = vmatpush1.msra.mxu0 0.0
        %340 = vmatprep.subr.mxu0 0.0
        %341 = vmatpush1.msra.mxu0 0.0
        %342 = vmatprep.subr.mxu0 0.0
        %343 = vmatpush1.msra.mxu0 0.0
        %344 = vmatprep.subr.mxu0 0.0
        %345 = vmatpush1.msra.mxu0 0.0
        %346 = vmatprep.subr.mxu0 0.0
        %347 = vmatpush1.msra.mxu0 0.0
        %348 = vmatprep.subr.mxu0 0.0
        %349 = vmatpush1.msra.mxu0 0.0
        %350 = vmatprep.subr.mxu0 0.0
        %351 = vmatpush1.msra.mxu0 0.0
        %352 = vmatprep.subr.mxu0 0.0
        %353 = vmatpush1.msra.mxu0 0.0
        %354 = vmatprep.subr.mxu0 0.0
        %355 = vmatpush1.msra.mxu0 0.0
        %356 = vmatprep.subr.mxu0 0.0
        %357 = vmatpush1.msra.mxu0 0.0
        %358 = vmatprep.subr.mxu0 0.0
        %359 = vmatpush1.msra.mxu0 0.0
        %360 = vmatprep.subr.mxu0 0.0
        %361 = vmatpush1.msra.mxu0 0.0
        %362 = vmatprep.subr.mxu0 0.0
        %363 = vmatpush1.msra.mxu0 0.0
        %364 = vmatprep.subr.mxu0 0.0
        %365 = vmatpush1.msra.mxu0 0.0
        %366 = vmatprep.subr.mxu0 0.0
        %367 = vmatpush1.msra.mxu0 0.0
        %368 = vmatprep.subr.mxu0 0.0
        %369 = vmatpush1.msra.mxu0 0.0
        %370 = vmatprep.subr.mxu0 0.0
        %371 = vmatpush1.msra.mxu0 0.0
        %372 = vmatprep.subr.mxu0 0.0
        %373 = vmatpush1.msra.mxu0 0.0
        %374 = vmatprep.subr.mxu0 0.0
        %375 = vmatpush1.msra.mxu0 0.0
        %376 = vmatprep.subr.mxu0 0.0
        %377 = vmatpush1.msra.mxu0 0.0
        %378 = vmatprep.subr.mxu0 0.0
        %379 = vmatpush1.msra.mxu0 0.0
        %380 = vmatprep.subr.mxu0 0.0
        %381 = vmatpush1.msra.mxu0 0.0
        %382 = vmatprep.mubr.f32.mxu0 0.0
        %383 = vmatmul.mubr.f32.gmra.mrb[0].mxu0 %v316
        %v384 = vpop.f32.mrb[0].mxu0
        %v385 = vadd.f32 0.0, %v384
        %v386 = vpop.f32.mrb[0].mxu0
        %v387 = vadd.f32 0.0, %v386
        %388 = vdwg.mxu0
        %v391 = vcombine.low %v310, %v312
        %v393 = vadd.f32 %v230, %v391
        %v396 = vcombine.low %v385, %v387
        %v398 = vadd.f32 %v393, %v396
        %399 = vst [vmem:[%s227] sm:$0xff] %v398
        %s400 = sand.u32 %s111, 1
        %s401 = scalar_lea.sflag [#allocation4], %s400
        %s402 = sand.u32 %s111, 1
        %s403 = smul.addr %s402, 8
        %s404 = scalar_lea.vmem [#allocation8], %s403
        // Predicated region
        $region45: #{tpu_custom_call.1} parent=31 // pred_check
          %p405 = pneg %p121
        $region46: #{tpu_custom_call.1} parent=31 // pred_check_branch
          %407 = sbr.rel (%p405) target = $region48
        $region47: #{tpu_custom_call.1} parent=31 // pred_region
          %s408 = smul.u32 2, %s24
          %s410 = ssub.s32 128, 128
          %411 = vsyncadd %s401, %s410
          %s412 = smul.addr %s23, 2
          %s413 = sadd.s32 %s408, %s412
          %s414 = smul.addr %s413, 64
          %s415 = scalar_lea.hbm %s3, %s414
          %s417 = sshll.u32 %s404, 4
          %s418 = int_to_ptr.vmem [resolvable:$true] %s417
          %420 = dma.vmem_to_hbm [thread:$0]  %s418, 128, %s415, %s401
        $region48: #{tpu_custom_call.1} parent=31 // pred_fallthru
          _
      $region32: #{tpu_custom_call.1} parent=5 // pred_fallthru
        _
      %p421 = scmp.le.s32.totalorder 2, %s14
      // Predicated region
      $region49: #{tpu_custom_call.1} parent=5 // pred_check
        %p422 = pneg %p421
      $region50: #{tpu_custom_call.1} parent=5 // pred_check_branch
        %424 = sbr.rel (%p422) target = $region52
      $region51: #{tpu_custom_call.1} parent=5 // pred_region
        %s425 = ssub.s32 %s14, 2
        // Predicated region
        $region53: #{tpu_custom_call.1} parent=51 // pred_check
          %p426 = pneg %p127
        $region54: #{tpu_custom_call.1} parent=51 // pred_check_branch
          %428 = sbr.rel (%p426) target = $region56
        $region55: #{tpu_custom_call.1} parent=51 // pred_region
          %s429 = sand.u32 %s112, 1
          %s430 = scalar_lea.sflag [#allocation4], %s429
          %s431 = sand.u32 %s112, 1
          %s432 = smul.addr %s431, 8
          %s433 = scalar_lea.vmem [#allocation8], %s432
          %434 = dma.done %s430, 128
        $region56: #{tpu_custom_call.1} parent=51 // pred_fallthru
          _
      $region52: #{tpu_custom_call.1} parent=5 // pred_fallthru
        _
    $region6: #{tpu_custom_call.1} parent=1 // loop_footer
      %s18 = sadd.s32 1, %s14
    $region7: #{tpu_custom_call.1} parent=1 // loop_footer_branch
      %13 = sbr.rel target = $region3
    $region8: #{tpu_custom_call.1} parent=1 // loop_exit
      _
    %435 = vsyncpa [#allocation3], 1
    %s436 = scalar_lea.sflag [#allocation3], 1
    %437 = vsyncpa %s436, 1
    %438 = vsyncpa [#allocation6], 1
    %439 = vsyncpa [#allocation4], 1
    %s440 = scalar_lea.sflag [#allocation4], 1
    %441 = vsyncpa %s440, 1

</llo_original>
